<compile_context>
chip_gen: v5e
topology: v5e:2x2
jax: 0.10.0
libtpu: 0.0.40
codegen_flags: <defaults>
</compile_context>

<pallas_src>
import functools

import jax
import jax.numpy as jnp
from jax import lax
from jax.experimental import pallas as pl
from jax.experimental.pallas import tpu as pltpu

_LANE = 128


def _self_attention_kernel(x_ref, wqkv_ref, wout_ref, bout_ref, o_ref, *,
                           scale, head_dim):
    b_blk, T, C_pad = x_ref.shape
    H = head_dim

    # Flatten batch into rows so the projections run with M = b_blk * T.
    x2 = x_ref[...].reshape(b_blk * T, C_pad)                       # (M, C_pad)

    # Fused QKV projection: one MXU matmul with N = 3H (bias-free Linear).
    qkv2 = jnp.dot(x2, wqkv_ref[...],
                   preferred_element_type=jnp.float32)              # (M, 3H)
    qkv = qkv2.reshape(b_blk, T, 3 * H)

    # Fold the softmax scale (c ** -0.5, c = true embed_dim) into q.
    q = qkv[:, :, 0 * H:1 * H] * jnp.float32(scale)                 # (b, T, H)
    k = qkv[:, :, 1 * H:2 * H]
    v = qkv[:, :, 2 * H:3 * H]

    # Batched q @ k^T, contracting the head dims (no explicit transpose of k).
    wei = lax.dot_general(q, k, (((2,), (2,)), ((0,), (0,))),
                          preferred_element_type=jnp.float32)       # (b, T, T)

    # Causal mask (tril). Large finite negative is robust and identical after
    # softmax to -inf here (exp underflows to 0).
    row = lax.broadcasted_iota(jnp.int32, (b_blk, T, T), 1)
    col = lax.broadcasted_iota(jnp.int32, (b_blk, T, T), 2)
    wei = jnp.where(row >= col, wei, jnp.float32(-1e30))

    # Numerically-stable softmax; divide via EUP reciprocal + 1 Newton step.
    m = jnp.max(wei, axis=-1, keepdims=True)
    p = jnp.exp(wei - m)
    s = jnp.sum(p, axis=-1, keepdims=True)
    inv = pl.reciprocal(s, approx=True)
    inv = inv * (2.0 - s * inv)          # Newton refinement -> ~full f32 precision
    attn = p * inv                                                   # (b, T, T)

    # Attention-weighted values (batched), then output projection with bias.
    out = lax.dot_general(attn, v, (((2,), (1,)), ((0,), (0,))),
                          preferred_element_type=jnp.float32)        # (b, T, H)
    out2 = out.reshape(b_blk * T, H)
    y = jnp.dot(out2, wout_ref[...],
                preferred_element_type=jnp.float32) + bout_ref[...]  # (M, C_pad)

    o_ref[...] = y.reshape(b_blk, T, C_pad).astype(o_ref.dtype)


def _pad_last(a, target):
    pad = target - a.shape[-1]
    if pad == 0:
        return a
    cfg = [(0, 0)] * (a.ndim - 1) + [(0, pad)]
    return jnp.pad(a, cfg)


def self_attention(x, wq, wk, wv, wout, bout, *, b_blk=None):
    """x: (B, T, C); wq/wk/wv: (C, H); wout: (H, C); bout: (1, C)."""
    B, T, C = x.shape
    H = wq.shape[1]
    C_pad = ((C + _LANE - 1) // _LANE) * _LANE

    # Zero-pad the channel dim to a lane-dense 128 multiple (exact math: the
    # padded x columns multiply zero-padded weight rows).
    x_p = _pad_last(x, C_pad)                                   # (B, T, C_pad)
    wqkv_p = jnp.concatenate([wq, wk, wv], axis=1)              # (C, 3H) fused
    wqkv_p = jnp.pad(wqkv_p, ((0, C_pad - C), (0, 0)))          # (C_pad, 3H)
    wout_p = _pad_last(wout, C_pad)                             # (H, C_pad)
    bout_p = _pad_last(bout, C_pad)                             # (1, C_pad)

    # Block several batch elements per grid step (largest divisor of B <= 8).
    if b_blk is None:
        b_blk = 1
        for cand in range(min(B, 8), 0, -1):
            if B % cand == 0:
                b_blk = cand
                break
    assert B % b_blk == 0
    grid = (B // b_blk,)

    # Explicit VMEM budget: double-buffered x/out blocks + weights + working set.
    itemsize = 4
    x_blk_bytes = b_blk * T * C_pad * itemsize
    w_bytes = (C_pad * 3 * H + H * C_pad + C_pad) * itemsize
    work_bytes = b_blk * T * (2 * T + 4 * H + 2 * C_pad) * itemsize
    est = 4 * x_blk_bytes + 2 * w_bytes + 4 * work_bytes
    vmem_limit = int(min(96 * 1024 * 1024, max(16 * 1024 * 1024, 2 * est)))

    kernel = functools.partial(_self_attention_kernel,
                               scale=float(C) ** -0.5, head_dim=H)

    out_p = pl.pallas_call(
        kernel,
        out_shape=jax.ShapeDtypeStruct((B, T, C_pad), x.dtype),
        grid_spec=pltpu.PrefetchScalarGridSpec(
            num_scalar_prefetch=0,
            grid=grid,
            in_specs=[
                pl.BlockSpec((b_blk, T, C_pad), lambda i: (i, 0, 0)),  # x
                pl.BlockSpec((C_pad, 3 * H), lambda i: (0, 0)),        # fused qkv W
                pl.BlockSpec((H, C_pad), lambda i: (0, 0)),            # out W
                pl.BlockSpec((1, C_pad), lambda i: (0, 0)),            # out bias
            ],
            out_specs=pl.BlockSpec((b_blk, T, C_pad), lambda i: (i, 0, 0)),
        ),
        compiler_params=pltpu.CompilerParams(
            dimension_semantics=("parallel",),
            vmem_limit_bytes=vmem_limit,
        ),
    )(x_p, wqkv_p, wout_p, bout_p)

    return out_p[:, :, :C]


def reference_self_attention(x, wq, wk, wv, wout, bout):
    """Plain-JAX reference mirroring the PyTorch forward exactly."""
    B, T, C = x.shape
    q = x @ wq
    k = x @ wk
    v = x @ wv
    wei = (q @ jnp.swapaxes(k, -2, -1)) * (C ** -0.5)
    tril = jnp.tril(jnp.ones((T, T), dtype=jnp.float32))
    wei = jnp.where(tril == 0, -jnp.inf, wei)
    wei = jax.nn.softmax(wei, axis=-1)
    out = wei @ v
    out = out @ wout + bout
    return out


if __name__ == "__main__":
    # Small shapes consistent with the module's forward.
    B, T = 2, 8            # batch, sequence length (<= max_seq_len)
    embed_dim = 32         # C
    head_dim = 16          # H
    max_seq_len = 8

    key = jax.random.PRNGKey(0)
    kx, kqkv, kw, kb = jax.random.split(key, 4)

    x = jax.random.normal(kx, (B, T, embed_dim), dtype=jnp.float32)

    # nn.Linear(embed_dim, 3*head_dim, bias=False) weight stored transposed as
    # (C, 3H), split into wq/wk/wv, each (C, H).
    wqkv = jax.random.normal(kqkv, (embed_dim, 3 * head_dim), dtype=jnp.float32) * 0.1
    wq = wqkv[:, 0 * head_dim:1 * head_dim]
    wk = wqkv[:, 1 * head_dim:2 * head_dim]
    wv = wqkv[:, 2 * head_dim:3 * head_dim]
    # nn.Linear(head_dim, embed_dim) stored as (H, C) weight and (1, C) bias.
    wout = jax.random.normal(kw, (head_dim, embed_dim), dtype=jnp.float32) * 0.1
    bout = jax.random.normal(kb, (1, embed_dim), dtype=jnp.float32) * 0.1

    out = self_attention(x, wq, wk, wv, wout, bout)
    out = jax.block_until_ready(out)

    ref = reference_self_attention(x, wq, wk, wv, wout, bout)
    assert out.shape == (B, T, embed_dim)
    assert jnp.allclose(out, ref, atol=2e-4, rtol=2e-4), "mismatch vs reference"

    print("KERNEL_OK")
</pallas_src>

<mosaic_0001>
module attributes {stable_mosaic.version = 11 : i64} {
  func.func @_self_attention_kernel(%arg0: i32, %arg1: memref<2x8x128xf32, #tpu.memory_space<vmem>>, %arg2: memref<128x48xf32, #tpu.memory_space<vmem>>, %arg3: memref<16x128xf32, #tpu.memory_space<vmem>>, %arg4: memref<1x128xf32, #tpu.memory_space<vmem>>, %arg5: memref<2x8x128xf32, #tpu.memory_space<vmem>>) attributes {dimension_semantics = [#tpu.dimension_semantics<parallel>], iteration_bounds = array<i64: 1>, scalar_prefetch = 0 : i64, scratch_operands = 0 : i64, tpu.core_type = #tpu.core_type<tc>, window_params = [{transform_indices = @transform_0, window_bounds = array<i64: 2, 8, 128>}, {pipeline_mode = #tpu.pipeline_mode<synchronous>, transform_indices = @transform_1, window_bounds = array<i64: 128, 48>}, {pipeline_mode = #tpu.pipeline_mode<synchronous>, transform_indices = @transform_2, window_bounds = array<i64: 16, 128>}, {pipeline_mode = #tpu.pipeline_mode<synchronous>, transform_indices = @transform_3, window_bounds = array<i64: 1, 128>}, {transform_indices = @transform_4, window_bounds = array<i64: 2, 8, 128>}]} {
    %c0 = arith.constant 0 : index
    %c0_0 = arith.constant 0 : index
    %c0_1 = arith.constant 0 : index
    %0 = vector.load %arg1[%c0, %c0_0, %c0_1] : memref<2x8x128xf32, #tpu.memory_space<vmem>>, vector<2x8x128xf32>
    %1 = vector.shape_cast %0 : vector<2x8x128xf32> to vector<16x128xf32>
    %c0_2 = arith.constant 0 : index
    %c0_3 = arith.constant 0 : index
    %2 = vector.load %arg2[%c0_2, %c0_3] : memref<128x48xf32, #tpu.memory_space<vmem>>, vector<128x48xf32>
    %cst = arith.constant dense<0.000000e+00> : vector<16x48xf32>
    %3 = tpu.matmul %1, %2, %cst {dimension_numbers = #tpu.dot_dimension_numbers<[1], [0], [0], [1], [0, 0, 1, 1], [], []>} : vector<16x128xf32>, vector<128x48xf32>, vector<16x48xf32> -> vector<16x48xf32>
    %4 = vector.shape_cast %3 : vector<16x48xf32> to vector<2x8x48xf32>
    %5 = vector.extract_strided_slice %4 {offsets = [0, 0, 0], sizes = [2, 8, 16], strides = [1, 1, 1]} : vector<2x8x48xf32> to vector<2x8x16xf32>
    %cst_4 = arith.constant 0.176776692 : f32
    %6 = vector.broadcast %cst_4 : f32 to vector<2x8x16xf32>
    %7 = arith.mulf %5, %6 : vector<2x8x16xf32>
    %8 = vector.extract_strided_slice %4 {offsets = [0, 0, 16], sizes = [2, 8, 16], strides = [1, 1, 1]} : vector<2x8x48xf32> to vector<2x8x16xf32>
    %9 = vector.extract_strided_slice %4 {offsets = [0, 0, 32], sizes = [2, 8, 16], strides = [1, 1, 1]} : vector<2x8x48xf32> to vector<2x8x16xf32>
    %cst_5 = arith.constant dense<0.000000e+00> : vector<2x8x8xf32>
    %10 = tpu.matmul %7, %8, %cst_5 {dimension_numbers = #tpu.dot_dimension_numbers<[2], [2], [1], [1], [0, 0, 0, 1, 1, 1], [0], [0]>} : vector<2x8x16xf32>, vector<2x8x16xf32>, vector<2x8x8xf32> -> vector<2x8x8xf32>
    %11 = tpu.iota {dimensions = array<i32: 1>} : vector<2x8x8xi32>
    %12 = tpu.iota {dimensions = array<i32: 2>} : vector<2x8x8xi32>
    %13 = arith.cmpi sge, %11, %12 : vector<2x8x8xi32>
    %cst_6 = arith.constant -1.000000e+30 : f32
    %14 = vector.broadcast %cst_6 : f32 to vector<2x8x8xf32>
    %15 = arith.select %13, %10, %14 : vector<2x8x8xi1>, vector<2x8x8xf32>
    %cst_7 = arith.constant dense<0xFF800000> : vector<2x8xf32>
    %16 = vector.multi_reduction <maximumf>, %15, %cst_7 [2] : vector<2x8x8xf32> to vector<2x8xf32>
    %17 = vector.shape_cast %16 : vector<2x8xf32> to vector<2x8x1xf32>
    %18 = vector.broadcast %17 : vector<2x8x1xf32> to vector<2x8x8xf32>
    %19 = arith.subf %15, %18 : vector<2x8x8xf32>
    %20 = math.exp %19 : vector<2x8x8xf32>
    %cst_8 = arith.constant dense<0.000000e+00> : vector<2x8xf32>
    %21 = vector.multi_reduction <add>, %20, %cst_8 [2] : vector<2x8x8xf32> to vector<2x8xf32>
    %22 = vector.shape_cast %21 : vector<2x8xf32> to vector<2x8x1xf32>
    %23 = tpu.reciprocal %22 {approx = true} : vector<2x8x1xf32> -> vector<2x8x1xf32>
    %24 = arith.mulf %22, %23 : vector<2x8x1xf32>
    %cst_9 = arith.constant 2.000000e+00 : f32
    %25 = vector.broadcast %cst_9 : f32 to vector<2x8x1xf32>
    %26 = arith.subf %25, %24 : vector<2x8x1xf32>
    %27 = arith.mulf %23, %26 : vector<2x8x1xf32>
    %28 = vector.broadcast %27 : vector<2x8x1xf32> to vector<2x8x8xf32>
    %29 = arith.mulf %20, %28 : vector<2x8x8xf32>
    %cst_10 = arith.constant dense<0.000000e+00> : vector<2x8x16xf32>
    %30 = tpu.matmul %29, %9, %cst_10 {dimension_numbers = #tpu.dot_dimension_numbers<[2], [1], [1], [2], [0, 0, 0, 1, 1, 2], [0], [0]>} : vector<2x8x8xf32>, vector<2x8x16xf32>, vector<2x8x16xf32> -> vector<2x8x16xf32>
    %31 = vector.shape_cast %30 : vector<2x8x16xf32> to vector<16x16xf32>
    %c0_11 = arith.constant 0 : index
    %c0_12 = arith.constant 0 : index
    %32 = vector.load %arg3[%c0_11, %c0_12] : memref<16x128xf32, #tpu.memory_space<vmem>>, vector<16x128xf32>
    %cst_13 = arith.constant dense<0.000000e+00> : vector<16x128xf32>
    %33 = tpu.matmul %31, %32, %cst_13 {dimension_numbers = #tpu.dot_dimension_numbers<[1], [0], [0], [1], [0, 0, 1, 1], [], []>} : vector<16x16xf32>, vector<16x128xf32>, vector<16x128xf32> -> vector<16x128xf32>
    %c0_14 = arith.constant 0 : index
    %c0_15 = arith.constant 0 : index
    %34 = vector.load %arg4[%c0_14, %c0_15] : memref<1x128xf32, #tpu.memory_space<vmem>>, vector<1x128xf32>
    %35 = vector.broadcast %34 : vector<1x128xf32> to vector<16x128xf32>
    %36 = arith.addf %33, %35 : vector<16x128xf32>
    %37 = vector.shape_cast %36 : vector<16x128xf32> to vector<2x8x128xf32>
    %c0_16 = arith.constant 0 : index
    %c0_17 = arith.constant 0 : index
    %c0_18 = arith.constant 0 : index
    %38 = vector.load %arg5[%c0_16, %c0_17, %c0_18] : memref<2x8x128xf32, #tpu.memory_space<vmem>>, vector<2x8x128xf32>
    tpu.vector_store %arg5[%c0_16, %c0_17, %c0_18], %37 {strides = array<i32>} : memref<2x8x128xf32, #tpu.memory_space<vmem>>, vector<2x8x128xf32>,
    return
  }
  func.func @transform_0(%arg0: i32) -> (i32, i32, i32) {
    %c0_i32 = arith.constant 0 : i32
    %c0_i32_0 = arith.constant 0 : i32
    %c0_i32_1 = arith.constant 0 : i32
    return %arg0, %c0_i32, %c0_i32_0 : i32, i32, i32
  }
  func.func @transform_1(%arg0: i32) -> (i32, i32) {
    %c0_i32 = arith.constant 0 : i32
    %c0_i32_0 = arith.constant 0 : i32
    %c0_i32_1 = arith.constant 0 : i32
    return %c0_i32, %c0_i32_0 : i32, i32
  }
  func.func @transform_2(%arg0: i32) -> (i32, i32) {
    %c0_i32 = arith.constant 0 : i32
    %c0_i32_0 = arith.constant 0 : i32
    %c0_i32_1 = arith.constant 0 : i32
    return %c0_i32, %c0_i32_0 : i32, i32
  }
  func.func @transform_3(%arg0: i32) -> (i32, i32) {
    %c0_i32 = arith.constant 0 : i32
    %c0_i32_0 = arith.constant 0 : i32
    %c0_i32_1 = arith.constant 0 : i32
    return %c0_i32, %c0_i32_0 : i32, i32
  }
  func.func @transform_4(%arg0: i32) -> (i32, i32, i32) {
    %c0_i32 = arith.constant 0 : i32
    %c0_i32_0 = arith.constant 0 : i32
    %c0_i32_1 = arith.constant 0 : i32
    return %arg0, %c0_i32, %c0_i32_0 : i32, i32, i32
  }
}

</mosaic_0001>

<llo_original>
// kernel: tpu_custom_call.1
$region0: #{tpu_custom_call.1}
  #allocation0 [shape = 'u32[]', space=smem, size = 0x4, offset = 0x4, fixed_abs, tag = 'smem constant byte address 0x4 - core index']
  #allocation1 [shape = 'u32[72,128]{1,0:T(1,128)}', space=vmem, size = 0x9000, scoped, tag = 'internal scratch']
  %s0 = inlined_call_operand.vmem [shape: f32[2,8,128], index: 0, kind: input, shape index: {}]
  %s1 = inlined_call_operand.vmem [shape: f32[128,48], index: 1, kind: input, shape index: {}]
  %s2 = inlined_call_operand.vmem [shape: f32[16,128], index: 2, kind: input, shape index: {}]
  %s3 = inlined_call_operand.vmem [shape: f32[1,128], index: 3, kind: input, shape index: {}]
  %s4 = inlined_call_operand.hbm [shape: f32[2,8,128], index: 4, kind: output, shape index: {}]
  %s5 = sld [smem:[#allocation0]]
  $region26: #{tpu_custom_call.1} parent=0
    _
  %s7 = ssub.s32 1, %s5
  %s8 = scalar_select 0, %s7, %s5
  $region1: #{tpu_custom_call.1} parent=0
    #allocation2 [shape = 'u8[8192]{0}', space=vmem, size = 0x2000, scoped, tag = 'output window, operand 0, single buffered']
    #allocation3 [shape = 's32[1]{0}', space=sflag, size = 0x4, scoped, tag = 'scoped memory for tpu_custom_call.1']
    %9 = vsyncpa [#allocation3], 0
    // Predicated region
    $region2: #{tpu_custom_call.1} parent=1 // pred_check
      _
    $region3: #{tpu_custom_call.1} parent=1 // pred_check_branch
      %11 = sbr.rel (0) target = $region5
    $region4: #{tpu_custom_call.1} parent=1 // pred_region
      _
    $region5: #{tpu_custom_call.1} parent=1 // pred_fallthru
      _
    // Predicated region
    $region6: #{tpu_custom_call.1} parent=1 // pred_check
      _
    $region7: #{tpu_custom_call.1} parent=1 // pred_check_branch
      %13 = sbr.rel (0) target = $region9
    $region8: #{tpu_custom_call.1} parent=1 // pred_region
      _
    $region9: #{tpu_custom_call.1} parent=1 // pred_fallthru
      _
    // Predicated region
    $region10: #{tpu_custom_call.1} parent=1 // pred_check
      _
    $region11: #{tpu_custom_call.1} parent=1 // pred_check_branch
      %15 = sbr.rel (0) target = $region13
    $region12: #{tpu_custom_call.1} parent=1 // pred_region
      _
    $region13: #{tpu_custom_call.1} parent=1 // pred_fallthru
      _
    // Predicated region
    $region14: #{tpu_custom_call.1} parent=1 // pred_check
      _
    $region15: #{tpu_custom_call.1} parent=1 // pred_check_branch
      %17 = sbr.rel (0) target = $region17
    $region16: #{tpu_custom_call.1} parent=1 // pred_region
      _
    $region17: #{tpu_custom_call.1} parent=1 // pred_fallthru
      _
    %v18 = vld [vmem:[%s0] sm:$0xff]
    %v19 = vld [vmem:[%s0 + $0x8] sm:$0xff]
    %v20 = vld [vmem:[%s1] sm:$0xff]
    %v21 = vld [vmem:[%s1 + $0x8] sm:$0xff]
    %v22 = vld [vmem:[%s1 + $0x10] sm:$0xff]
    %v23 = vld [vmem:[%s1 + $0x18] sm:$0xff]
    %v24 = vld [vmem:[%s1 + $0x20] sm:$0xff]
    %v25 = vld [vmem:[%s1 + $0x28] sm:$0xff]
    %v26 = vld [vmem:[%s1 + $0x30] sm:$0xff]
    %v27 = vld [vmem:[%s1 + $0x38] sm:$0xff]
    %v28 = vld [vmem:[%s1 + $0x40] sm:$0xff]
    %v29 = vld [vmem:[%s1 + $0x48] sm:$0xff]
    %v30 = vld [vmem:[%s1 + $0x50] sm:$0xff]
    %v31 = vld [vmem:[%s1 + $0x58] sm:$0xff]
    %v32 = vld [vmem:[%s1 + $0x60] sm:$0xff]
    %v33 = vld [vmem:[%s1 + $0x68] sm:$0xff]
    %v34 = vld [vmem:[%s1 + $0x70] sm:$0xff]
    %v35 = vld [vmem:[%s1 + $0x78] sm:$0xff]
    %36 = vmatpush.msra.mxu0 %v35
    %37 = vmatpush.msra.mxu0 %v34
    %38 = vmatpush.msra.mxu0 %v33
    %39 = vmatpush.msra.mxu0 %v32
    %40 = vmatpush.msra.mxu0 %v31
    %41 = vmatpush.msra.mxu0 %v30
    %42 = vmatpush.msra.mxu0 %v29
    %43 = vmatpush.msra.mxu0 %v28
    %44 = vmatpush.msra.mxu0 %v27
    %45 = vmatpush.msra.mxu0 %v26
    %46 = vmatpush.msra.mxu0 %v25
    %47 = vmatpush.msra.mxu0 %v24
    %48 = vmatpush.msra.mxu0 %v23
    %49 = vmatpush.msra.mxu0 %v22
    %50 = vmatpush.msra.mxu0 %v21
    %51 = vmatpush.msra.mxu0 %v20
    %52 = vmatmul.f32.gmra.mxu0 %v18
    %v53 = vpop.f32.mrf.mxu0
    %v54 = vadd.f32 0.0, %v53
    %55 = vmatmul.f32.gmra.mxu0 %v19
    %v56 = vpop.f32.mrf.mxu0
    %v57 = vadd.f32 0.0, %v56
    %58 = vdwg.mxu0
    %v59 = vmul.f32 %v54, 0.17677669
    %v60 = vmul.f32 %v57, 0.17677669
    %62 = vrot.lane.b32.xlu0 %v54, 112
    %v63 = vpop.permute.xlu0 %62
    %vm64 = vcmask 130048
    %v66 = vsel %vm64, %v59, 0
    %v68 = vsel %vm64, %v63, 0
    %70 = vmatpush.xpose.msra.mxu0 0.0
    %71 = vmatpush.xpose.msra.mxu0 0.0
    %72 = vmatpush.xpose.msra.mxu0 0.0
    %73 = vmatpush.xpose.msra.mxu0 0.0
    %74 = vmatpush.xpose.msra.mxu0 0.0
    %75 = vmatpush.xpose.msra.mxu0 0.0
    %76 = vmatpush.xpose.msra.mxu0 0.0
    %77 = vmatpush.xpose.msra.mxu0 0.0
    %78 = vmatpush.xpose.msra.mxu0 0.0
    %79 = vmatpush.xpose.msra.mxu0 0.0
    %80 = vmatpush.xpose.msra.mxu0 0.0
    %81 = vmatpush.xpose.msra.mxu0 0.0
    %82 = vmatpush.xpose.msra.mxu0 0.0
    %83 = vmatpush.xpose.msra.mxu0 0.0
    %84 = vmatpush.xpose.msra.mxu0 0.0
    %85 = vmatpush.xpose.msra.mxu0 %v68
    %86 = vmatmul.f32.gmra.mxu0 %v66
    %v87 = vpop.f32.mrf.mxu0
    %v88 = vadd.f32 0.0, %v87
    %89 = vdwg.mxu0
    %91 = vrot.lane.b32.xlu0 %v57, 112
    %v92 = vpop.permute.xlu0 %91
    %v94 = vsel %vm64, %v60, 0
    %v96 = vsel %vm64, %v92, 0
    %98 = vmatpush.xpose.msra.mxu0 0.0
    %99 = vmatpush.xpose.msra.mxu0 0.0
    %100 = vmatpush.xpose.msra.mxu0 0.0
    %101 = vmatpush.xpose.msra.mxu0 0.0
    %102 = vmatpush.xpose.msra.mxu0 0.0
    %103 = vmatpush.xpose.msra.mxu0 0.0
    %104 = vmatpush.xpose.msra.mxu0 0.0
    %105 = vmatpush.xpose.msra.mxu0 0.0
    %106 = vmatpush.xpose.msra.mxu0 0.0
    %107 = vmatpush.xpose.msra.mxu0 0.0
    %108 = vmatpush.xpose.msra.mxu0 0.0
    %109 = vmatpush.xpose.msra.mxu0 0.0
    %110 = vmatpush.xpose.msra.mxu0 0.0
    %111 = vmatpush.xpose.msra.mxu0 0.0
    %112 = vmatpush.xpose.msra.mxu0 0.0
    %113 = vmatpush.xpose.msra.mxu0 %v96
    %114 = vmatmul.f32.gmra.mxu0 %v94
    %v115 = vpop.f32.mrf.mxu0
    %v116 = vadd.f32 0.0, %v115
    %117 = vdwg.mxu0
    %v118 = vlaneseq
    %v119 = vshrl.u32 %v118, 7
    %v120 = vlaneseq
    %v121 = vand.u32 %v120, 127
    %vm122 = vcmp.ge.s32.totalorder %v119, %v121
    %v123 = vsel %vm122, %v88, -1e+30
    %v124 = vsel %vm122, %v116, -1e+30
    %vm125 = vcmask 64512
    %v126 = vsel %vm125, %v123, -inf
    %127 = vmax.xlane.f32.xlu0 %v126
    %v128 = vpop.xlane.xlu0 %127
    %v129 = vsel %vm125, %v124, -inf
    %130 = vmax.xlane.f32.xlu0 %v129
    %v131 = vpop.xlane.xlu0 %130
    %v132 = vsub.f32 %v123, %v128
    %v133 = vsub.f32 %v124, %v131
    %v134 = vmul.f32 %v132, 1.442695
    %v135 = vpow.pop %v134
    %v136 = vmul.f32 %v133, 1.442695
    %v137 = vpow.pop %v136
    %v138 = vsel %vm125, %v135, 0.0
    %139 = vadd.xlane.f32.xlu0 %v138
    %v140 = vpop.xlane.xlu0 %139
    %v141 = vsel %vm125, %v137, 0.0
    %142 = vadd.xlane.f32.xlu0 %v141
    %v143 = vpop.xlane.xlu0 %142
    %v144 = vrcp.pop %v140
    %v145 = vrcp.pop %v143
    %v146 = vmul.f32 %v140, %v144
    %v147 = vmul.f32 %v143, %v145
    %v148 = vsub.f32 2.0, %v146
    %v149 = vsub.f32 2.0, %v147
    %v150 = vmul.f32 %v144, %v148
    %v151 = vmul.f32 %v145, %v149
    %v152 = vmul.f32 %v135, %v150
    %v153 = vmul.f32 %v137, %v151
    %154 = vrot.lane.b32.xlu0 %v54, 96
    %v155 = vpop.permute.xlu0 %154
    %v158 = vsel %vm125, %v152, 0
    %160 = vmatpush.msra.mxu0 0.0
    %161 = vmatpush.msra.mxu0 0.0
    %162 = vmatpush.msra.mxu0 0.0
    %163 = vmatpush.msra.mxu0 0.0
    %164 = vmatpush.msra.mxu0 0.0
    %165 = vmatpush.msra.mxu0 0.0
    %166 = vmatpush.msra.mxu0 0.0
    %167 = vmatpush.msra.mxu0 0.0
    %168 = vmatpush.msra.mxu0 0.0
    %169 = vmatpush.msra.mxu0 0.0
    %170 = vmatpush.msra.mxu0 0.0
    %171 = vmatpush.msra.mxu0 0.0
    %172 = vmatpush.msra.mxu0 0.0
    %173 = vmatpush.msra.mxu0 0.0
    %174 = vmatpush.msra.mxu0 0.0
    %175 = vmatpush.msra.mxu0 %v155
    %176 = vmatmul.f32.gmra.mxu0 %v158
    %v177 = vpop.f32.mrf.mxu0
    %v178 = vadd.f32 0.0, %v177
    %179 = vdwg.mxu0
    %180 = vrot.lane.b32.xlu0 %v57, 96
    %v181 = vpop.permute.xlu0 %180
    %v184 = vsel %vm125, %v153, 0
    %186 = vmatpush.msra.mxu0 0.0
    %187 = vmatpush.msra.mxu0 0.0
    %188 = vmatpush.msra.mxu0 0.0
    %189 = vmatpush.msra.mxu0 0.0
    %190 = vmatpush.msra.mxu0 0.0
    %191 = vmatpush.msra.mxu0 0.0
    %192 = vmatpush.msra.mxu0 0.0
    %193 = vmatpush.msra.mxu0 0.0
    %194 = vmatpush.msra.mxu0 0.0
    %195 = vmatpush.msra.mxu0 0.0
    %196 = vmatpush.msra.mxu0 0.0
    %197 = vmatpush.msra.mxu0 0.0
    %198 = vmatpush.msra.mxu0 0.0
    %199 = vmatpush.msra.mxu0 0.0
    %200 = vmatpush.msra.mxu0 0.0
    %201 = vmatpush.msra.mxu0 %v181
    %202 = vmatmul.f32.gmra.mxu0 %v184
    %v203 = vpop.f32.mrf.mxu0
    %v204 = vadd.f32 0.0, %v203
    %205 = vdwg.mxu0
    %v206 = vld [vmem:[%s2] sm:$0xff]
    %v207 = vld [vmem:[%s2 + $0x8] sm:$0xff]
    %v208 = vld [vmem:[%s3] sm:$0x1]
    %v210 = vperm.slane %v208, 0
    %v213 = vsel %vm64, %v178, 0
    %v216 = vsel %vm64, %v204, 0
    %218 = vmatpush.msra.mxu0 0.0
    %219 = vmatpush.msra.mxu0 0.0
    %220 = vmatpush.msra.mxu0 0.0
    %221 = vmatpush.msra.mxu0 0.0
    %222 = vmatpush.msra.mxu0 0.0
    %223 = vmatpush.msra.mxu0 0.0
    %224 = vmatpush.msra.mxu0 0.0
    %225 = vmatpush.msra.mxu0 0.0
    %226 = vmatpush.msra.mxu0 0.0
    %227 = vmatpush.msra.mxu0 0.0
    %228 = vmatpush.msra.mxu0 0.0
    %229 = vmatpush.msra.mxu0 0.0
    %230 = vmatpush.msra.mxu0 0.0
    %231 = vmatpush.msra.mxu0 0.0
    %232 = vmatpush.msra.mxu0 %v207
    %233 = vmatpush.msra.mxu0 %v206
    %234 = vmatmul.f32.gmra.mxu0 %v213
    %v235 = vpop.f32.mrf.mxu0
    %v236 = vadd.f32 %v210, %v235
    %237 = vmatmul.f32.gmra.mxu0 %v216
    %v238 = vpop.f32.mrf.mxu0
    %v239 = vadd.f32 %v210, %v238
    %240 = vdwg.mxu0
    %241 = vst [vmem:[#allocation2] sm:$0xff] %v236
    %242 = vst [vmem:[#allocation2 + $0x8] sm:$0xff] %v239
    // Predicated region
    $region18: #{tpu_custom_call.1} parent=1 // pred_check
      _
    $region19: #{tpu_custom_call.1} parent=1 // pred_check_branch
      %244 = sbr.rel (0) target = $region21
    $region20: #{tpu_custom_call.1} parent=1 // pred_region
      %246 = vsyncadd [#allocation3], 0
      %s247 = sshll.u32 [#allocation2], 4
      %s248 = int_to_ptr.vmem [resolvable:$true] %s247
      %s249 = sshll.u32 %s4, 4
      %s250 = int_to_ptr.hbm [resolvable:$true] %s249
      %255 = dma.vmem_to_hbm [thread:$0]  %s248, 256, %s250, [#allocation3], 128, 128, 8
    $region21: #{tpu_custom_call.1} parent=1 // pred_fallthru
      _
    // Predicated region
    $region22: #{tpu_custom_call.1} parent=1 // pred_check
      _
    $region23: #{tpu_custom_call.1} parent=1 // pred_check_branch
      %257 = sbr.rel (0) target = $region25
    $region24: #{tpu_custom_call.1} parent=1 // pred_region
      %259 = dma.done [#allocation3], 256
    $region25: #{tpu_custom_call.1} parent=1 // pred_fallthru
      _
    %260 = vsyncpa [#allocation3], 1

</llo_original>
